<compile_context>
chip_gen: v6e
topology: v6e:2x2x1
jax: 0.10.0
libtpu: 0.0.40
codegen_flags: <defaults>
</compile_context>

<pallas_src>
import functools

import jax
import jax.numpy as jnp
from jax import lax
from jax.experimental import pallas as pl
from jax.experimental.pallas import tpu as pltpu


# ----------------------------- kernels -------------------------------------


def fc_relu_kernel(x_ref, wt_ref, b_ref, o_ref):
    # x: [tile, D_in], wt: [D_in, D_out] (already transposed), b: [1, D_out]
    y = jnp.dot(x_ref[...], wt_ref[...], preferred_element_type=jnp.float32)
    # Emit the Gram-operand dtype directly (no extra HBM round trip later).
    o_ref[...] = jnp.maximum(y + b_ref[...], 0.0).astype(o_ref.dtype)


def gram_sigmoid_kernel(a_ref, b_ref, o_ref, *, approx):
    # a: [tm, D], b: [n_or_tn, D]; contract on last dims -> [tm, ...] == a @ b.T
    acc = lax.dot_general(
        a_ref[...], b_ref[...],
        dimension_numbers=(((1,), (1,)), ((), ())),
        preferred_element_type=jnp.float32)
    # sigmoid(x) = 1 / (1 + exp(-x)); exp and reciprocal both live on the EUP.
    sig = pl.reciprocal(1.0 + jnp.exp(-acc), approx=approx)
    o_ref[...] = sig.astype(o_ref.dtype)


# ----------------------------- helpers -------------------------------------

_RESIDENT_B_BYTES = 8 << 20   # keep B fully in VMEM if 2*n*d*itemsize <= this


def _round_up(x, m):
    return (x + m - 1) // m * m


def _pick_tile(n_pad, max_tile):
    """Largest multiple of 128 <= max_tile that divides n_pad (n_pad % 128 == 0)."""
    t = min(_round_up(max_tile, 128), n_pad)
    t = t // 128 * 128
    while t > 128 and n_pad % t != 0:
        t -= 128
    return max(t, 128)


def _vmem_limit(footprint_bytes):
    # 50% headroom over the double-buffered footprint; clamp to a range that
    # is safe on v5e/v6e (128 MiB physical) and v7x (64 MiB physical).
    want = int(footprint_bytes * 1.5) + (4 << 20)
    return max(32 << 20, min(48 << 20, want))


# ----------------------------- wrappers ------------------------------------


def _fc_relu(x_pad, w_t_pad, b_pad, tile, out_dtype):
    n, d_in = x_pad.shape
    d_out = w_t_pad.shape[1]
    out_item = jnp.dtype(out_dtype).itemsize
    footprint = (2 * tile * d_in * 4          # x blocks (double-buffered)
                 + 2 * d_in * d_out * 4       # resident weight
                 + 2 * d_out * 4              # resident bias
                 + 2 * tile * d_out * out_item)
    return pl.pallas_call(
        fc_relu_kernel,
        out_shape=jax.ShapeDtypeStruct((n, d_out), out_dtype),
        grid=(n // tile,),
        in_specs=[
            pl.BlockSpec((tile, d_in), lambda i: (i, 0)),
            pl.BlockSpec((d_in, d_out), lambda i: (0, 0)),   # resident weight
            pl.BlockSpec((1, d_out), lambda i: (0, 0)),      # resident bias
        ],
        out_specs=pl.BlockSpec((tile, d_out), lambda i: (i, 0)),
        compiler_params=pltpu.CompilerParams(
            dimension_semantics=("parallel",),
            vmem_limit_bytes=_vmem_limit(footprint)),
    )(x_pad, w_t_pad, b_pad)


def _gram_sigmoid(a, b, tm, tn, out_dtype):
    m, d = a.shape
    n = b.shape[0]
    in_item = jnp.dtype(a.dtype).itemsize
    out_item = jnp.dtype(out_dtype).itemsize

    resident_b = 2 * n * d * in_item <= _RESIDENT_B_BYTES
    if resident_b:
        # Whole B operand held in VMEM; fetched once, never re-DMA'd.
        b_spec = pl.BlockSpec((n, d), lambda i, j: (0, 0))
        b_read_elems = n * d
        b_vmem = 2 * n * d * in_item
    else:
        b_spec = pl.BlockSpec((tn, d), lambda i, j: (j, 0))
        b_read_elems = (m // tm) * n * d
        b_vmem = 2 * tn * d * in_item

    footprint = 2 * tm * d * in_item + b_vmem + 2 * tm * tn * out_item
    approx = out_item < 4   # approximate EUP reciprocal only for low-prec outs

    cost = pl.CostEstimate(
        flops=2 * m * n * d,
        transcendentals=2 * m * n,   # exp + reciprocal per output element
        bytes_accessed=(m * d + b_read_elems) * in_item + m * n * out_item,
    )
    return pl.pallas_call(
        functools.partial(gram_sigmoid_kernel, approx=approx),
        out_shape=jax.ShapeDtypeStruct((m, n), out_dtype),
        grid=(m // tm, n // tn),
        in_specs=[
            pl.BlockSpec((tm, d), lambda i, j: (i, 0)),
            b_spec,
        ],
        out_specs=pl.BlockSpec((tm, tn), lambda i, j: (i, j)),
        compiler_params=pltpu.CompilerParams(
            dimension_semantics=("parallel", "parallel"),
            vmem_limit_bytes=_vmem_limit(footprint)),
        cost_estimate=cost,
    )(a, b)


def pebg_forward(q_emb, s_emb, wq, bq, ws, bs, *,
                 gram_dtype=jnp.bfloat16, out_dtype=jnp.float32,
                 max_gram_tile=512, max_fc_tile=512):
    """Forward pass. wq/ws are PyTorch-style [out, in]; bq/bs are [out].

    gram_dtype: dtype of the fc outputs / Gram operands (f32 accumulate).
    out_dtype : dtype of the sigmoid logits (bf16 halves stage-2 writes).
    """
    num_q, emb_in = q_emb.shape
    num_s = s_emb.shape[0]
    emb_out = wq.shape[0]

    d_in = _round_up(emb_in, 128)
    d_out = _round_up(emb_out, 128)
    # Row padding only to lane/sublane alignment (128), decoupled from tiles.
    nq = _round_up(num_q, 128)
    ns = _round_up(num_s, 128)

    f32 = jnp.float32
    # Zero-pad inputs; pre-transpose weights to [in, out] so the kernel does
    # x @ W directly (no in-kernel .T).  Padded fc columns stay exactly zero
    # (zero weight column + zero bias -> relu -> 0), so they contribute
    # nothing to the Gram contractions; padded rows are sliced away at the end.
    q_p = jnp.zeros((nq, d_in), f32).at[:num_q, :emb_in].set(q_emb.astype(f32))
    s_p = jnp.zeros((ns, d_in), f32).at[:num_s, :emb_in].set(s_emb.astype(f32))
    wq_t = jnp.zeros((d_in, d_out), f32).at[:emb_in, :emb_out].set(wq.T.astype(f32))
    ws_t = jnp.zeros((d_in, d_out), f32).at[:emb_in, :emb_out].set(ws.T.astype(f32))
    bq_p = jnp.zeros((1, d_out), f32).at[0, :emb_out].set(bq.astype(f32))
    bs_p = jnp.zeros((1, d_out), f32).at[0, :emb_out].set(bs.astype(f32))

    # Stage 1: hoisted Linear + ReLU, emitting gram_dtype directly.
    q_fc = _fc_relu(q_p, wq_t, bq_p, _pick_tile(nq, max_fc_tile), gram_dtype)
    s_fc = _fc_relu(s_p, ws_t, bs_p, _pick_tile(ns, max_fc_tile), gram_dtype)

    # Stage 2: tiled Gram matrices + sigmoid, lane-dense output blocks.
    tq = _pick_tile(nq, max_gram_tile)
    ts = _pick_tile(ns, max_gram_tile)
    qs = _gram_sigmoid(q_fc, s_fc, tq, ts, out_dtype)[:num_q, :num_s]
    qq = _gram_sigmoid(q_fc, q_fc, tq, tq, out_dtype)[:num_q, :num_q]
    ss = _gram_sigmoid(s_fc, s_fc, ts, ts, out_dtype)[:num_s, :num_s]
    return qs, qq, ss


def pebg_reference(q_emb, s_emb, wq, bq, ws, bs):
    q_fc = jax.nn.relu(q_emb @ wq.T + bq)
    s_fc = jax.nn.relu(s_emb @ ws.T + bs)
    return (jax.nn.sigmoid(q_fc @ s_fc.T),
            jax.nn.sigmoid(q_fc @ q_fc.T),
            jax.nn.sigmoid(s_fc @ s_fc.T))


if __name__ == "__main__":
    # Small shapes consistent with the module: num_q questions, num_s skills.
    num_q, num_s, emb_dim = 16, 8, 32

    key = jax.random.PRNGKey(0)
    k_q, k_s, k_wq, k_bq, k_ws, k_bs = jax.random.split(key, 6)

    q_embedding = jax.random.normal(k_q, (num_q, emb_dim), dtype=jnp.float32)
    s_embedding = jax.random.normal(k_s, (num_s, emb_dim), dtype=jnp.float32)
    w_q = jax.random.normal(k_wq, (emb_dim, emb_dim), dtype=jnp.float32) * 0.1
    b_q = jax.random.normal(k_bq, (emb_dim,), dtype=jnp.float32) * 0.1
    w_s = jax.random.normal(k_ws, (emb_dim, emb_dim), dtype=jnp.float32) * 0.1
    b_s = jax.random.normal(k_bs, (emb_dim,), dtype=jnp.float32) * 0.1

    ref = pebg_reference(q_embedding, s_embedding, w_q, b_q, w_s, b_s)

    # Exact path: f32 Gram operands + f32 logits -> tight tolerance.
    out_f32 = pebg_forward(q_embedding, s_embedding, w_q, b_q, w_s, b_s,
                           gram_dtype=jnp.float32, out_dtype=jnp.float32)
    jax.block_until_ready(out_f32)
    for got, want in zip(out_f32, ref):
        assert got.shape == want.shape
        assert jnp.allclose(got, want, atol=1e-5, rtol=1e-5)

    # Fast path: bf16 Gram operands (f32 accumulate), f32 logits.
    out_bf16 = pebg_forward(q_embedding, s_embedding, w_q, b_q, w_s, b_s,
                            gram_dtype=jnp.bfloat16, out_dtype=jnp.float32)
    jax.block_until_ready(out_bf16)
    for got, want in zip(out_bf16, ref):
        assert got.shape == want.shape
        assert jnp.allclose(got, want, atol=2e-2, rtol=2e-2)

    # Fastest path: bf16 operands AND bf16 logits (halves stage-2 HBM writes).
    out_fast = pebg_forward(q_embedding, s_embedding, w_q, b_q, w_s, b_s,
                            gram_dtype=jnp.bfloat16, out_dtype=jnp.bfloat16)
    jax.block_until_ready(out_fast)
    for got, want in zip(out_fast, ref):
        assert got.shape == want.shape
        assert jnp.allclose(got.astype(jnp.float32), want, atol=3e-2, rtol=3e-2)

    print("KERNEL_OK")
</pallas_src>

<mosaic_0001>
module attributes {stable_mosaic.version = 11 : i64} {
  func.func @fc_relu_kernel(%arg0: i32, %arg1: memref<128x128xf32, #tpu.memory_space<vmem>>, %arg2: memref<128x128xf32, #tpu.memory_space<vmem>>, %arg3: memref<1x128xf32, #tpu.memory_space<vmem>>, %arg4: memref<128x128xf32, #tpu.memory_space<vmem>>) attributes {dimension_semantics = [#tpu.dimension_semantics<parallel>], iteration_bounds = array<i64: 1>, scalar_prefetch = 0 : i64, scratch_operands = 0 : i64, tpu.core_type = #tpu.core_type<tc>, window_params = [{transform_indices = @transform_0, window_bounds = array<i64: 128, 128>}, {pipeline_mode = #tpu.pipeline_mode<synchronous>, transform_indices = @transform_1, window_bounds = array<i64: 128, 128>}, {pipeline_mode = #tpu.pipeline_mode<synchronous>, transform_indices = @transform_2, window_bounds = array<i64: 1, 128>}, {transform_indices = @transform_3, window_bounds = array<i64: 128, 128>}]} {
    %c0 = arith.constant 0 : index
    %c0_0 = arith.constant 0 : index
    %0 = vector.load %arg1[%c0, %c0_0] : memref<128x128xf32, #tpu.memory_space<vmem>>, vector<128x128xf32>
    %c0_1 = arith.constant 0 : index
    %c0_2 = arith.constant 0 : index
    %1 = vector.load %arg2[%c0_1, %c0_2] : memref<128x128xf32, #tpu.memory_space<vmem>>, vector<128x128xf32>
    %cst = arith.constant dense<0.000000e+00> : vector<128x128xf32>
    %2 = tpu.matmul %0, %1, %cst {dimension_numbers = #tpu.dot_dimension_numbers<[1], [0], [0], [1], [0, 0, 1, 1], [], []>} : vector<128x128xf32>, vector<128x128xf32>, vector<128x128xf32> -> vector<128x128xf32>
    %c0_3 = arith.constant 0 : index
    %c0_4 = arith.constant 0 : index
    %3 = vector.load %arg3[%c0_3, %c0_4] : memref<1x128xf32, #tpu.memory_space<vmem>>, vector<1x128xf32>
    %4 = vector.broadcast %3 : vector<1x128xf32> to vector<128x128xf32>
    %5 = arith.addf %2, %4 : vector<128x128xf32>
    %cst_5 = arith.constant 0.000000e+00 : f32
    %6 = vector.broadcast %cst_5 : f32 to vector<128x128xf32>
    %7 = arith.maximumf %5, %6 : vector<128x128xf32>
    %c0_6 = arith.constant 0 : index
    %c0_7 = arith.constant 0 : index
    %8 = vector.load %arg4[%c0_6, %c0_7] : memref<128x128xf32, #tpu.memory_space<vmem>>, vector<128x128xf32>
    tpu.vector_store %arg4[%c0_6, %c0_7], %7 {strides = array<i32>} : memref<128x128xf32, #tpu.memory_space<vmem>>, vector<128x128xf32>,
    return
  }
  func.func @transform_0(%arg0: i32) -> (i32, i32) {
    %c0_i32 = arith.constant 0 : i32
    %c0_i32_0 = arith.constant 0 : i32
    return %arg0, %c0_i32 : i32, i32
  }
  func.func @transform_1(%arg0: i32) -> (i32, i32) {
    %c0_i32 = arith.constant 0 : i32
    %c0_i32_0 = arith.constant 0 : i32
    %c0_i32_1 = arith.constant 0 : i32
    return %c0_i32, %c0_i32_0 : i32, i32
  }
  func.func @transform_2(%arg0: i32) -> (i32, i32) {
    %c0_i32 = arith.constant 0 : i32
    %c0_i32_0 = arith.constant 0 : i32
    %c0_i32_1 = arith.constant 0 : i32
    return %c0_i32, %c0_i32_0 : i32, i32
  }
  func.func @transform_3(%arg0: i32) -> (i32, i32) {
    %c0_i32 = arith.constant 0 : i32
    %c0_i32_0 = arith.constant 0 : i32
    return %arg0, %c0_i32 : i32, i32
  }
}

</mosaic_0001>

<llo_original>
// kernel: tpu_custom_call.1
$region0: #{tpu_custom_call.1}
  #allocation0 [shape = 'u32[]', space=smem, size = 0x4, offset = 0x4, fixed_abs, tag = 'smem constant byte address 0x4 - core index']
  #allocation1 [shape = 'u32[144,128]{1,0:T(1,128)}', space=vmem, size = 0x12000, scoped, tag = 'internal scratch']
  %s0 = inlined_call_operand.hbm [shape: f32[128,128], index: 0, kind: input, shape index: {}]
  %s1 = inlined_call_operand.hbm [shape: f32[128,128], index: 1, kind: input, shape index: {}]
  %s2 = inlined_call_operand.vmem [shape: f32[1,128], index: 2, kind: input, shape index: {}]
  %s3 = inlined_call_operand.hbm [shape: f32[128,128], index: 3, kind: output, shape index: {}]
  %s4 = sld [smem:[#allocation0]]
  $region30: #{tpu_custom_call.1} parent=0
    _
  %s6 = ssub.s32 1, %s4
  %s7 = scalar_select 0, %s6, %s4
  $region1: #{tpu_custom_call.1} parent=0
    #allocation2 [shape = 'u8[65536]{0}', space=vmem, size = 0x10000, scoped, tag = 'input window, operand 0, single buffered']
    #allocation3 [shape = 's32[1]{0}', space=sflag, size = 0x4, scoped, tag = 'scoped memory for tpu_custom_call.1']
    #allocation4 [shape = 's32[1]{0}', space=sflag, size = 0x4, scoped, tag = 'scoped memory for tpu_custom_call.1']
    #allocation5 [shape = 'u8[65536]{0}', space=vmem, size = 0x10000, scoped, tag = 'input window, operand 1, single buffered']
    #allocation6 [shape = 's32[1]{0}', space=sflag, size = 0x4, scoped, tag = 'scoped memory for tpu_custom_call.1']
    #allocation7 [shape = 'u8[65536]{0}', space=vmem, size = 0x10000, scoped, tag = 'output window, operand 0, single buffered']
    %8 = vsyncpa [#allocation3], 0
    %9 = vsyncpa [#allocation6], 0
    %10 = vsyncpa [#allocation4], 0
    // Predicated region
    $region2: #{tpu_custom_call.1} parent=1 // pred_check
      _
    $region3: #{tpu_custom_call.1} parent=1 // pred_check_branch
      %12 = sbr.rel (0) target = $region5
    $region4: #{tpu_custom_call.1} parent=1 // pred_region
      %s14 = ssub.s32 2048, 2048
      %15 = vsyncadd [#allocation3], %s14
      %s16 = sshll.u32 [#allocation2], 4
      %s17 = int_to_ptr.vmem [resolvable:$true] %s16
      %22 = dma.hbm_to_vmem [thread:$0]  %s0, 2048, %s17, [#allocation3], 128, 128, 8
    $region5: #{tpu_custom_call.1} parent=1 // pred_fallthru
      _
    // Predicated region
    $region6: #{tpu_custom_call.1} parent=1 // pred_check
      _
    $region7: #{tpu_custom_call.1} parent=1 // pred_check_branch
      %24 = sbr.rel (0) target = $region9
    $region8: #{tpu_custom_call.1} parent=1 // pred_region
      %s26 = ssub.s32 2048, 2048
      %27 = vsyncadd [#allocation6], %s26
      %s28 = sshll.u32 [#allocation5], 4
      %s29 = int_to_ptr.vmem [resolvable:$true] %s28
      %34 = dma.hbm_to_vmem [thread:$0]  %s1, 2048, %s29, [#allocation6], 128, 128, 8
    $region9: #{tpu_custom_call.1} parent=1 // pred_fallthru
      _
    // Predicated region
    $region10: #{tpu_custom_call.1} parent=1 // pred_check
      _
    $region11: #{tpu_custom_call.1} parent=1 // pred_check_branch
      %36 = sbr.rel (0) target = $region13
    $region12: #{tpu_custom_call.1} parent=1 // pred_region
      _
    $region13: #{tpu_custom_call.1} parent=1 // pred_fallthru
      _
    // Predicated region
    $region14: #{tpu_custom_call.1} parent=1 // pred_check
      _
    $region15: #{tpu_custom_call.1} parent=1 // pred_check_branch
      %38 = sbr.rel (0) target = $region17
    $region16: #{tpu_custom_call.1} parent=1 // pred_region
      %39 = dma.done [#allocation3], 2048
    $region17: #{tpu_custom_call.1} parent=1 // pred_fallthru
      _
    // Predicated region
    $region18: #{tpu_custom_call.1} parent=1 // pred_check
      _
    $region19: #{tpu_custom_call.1} parent=1 // pred_check_branch
      %41 = sbr.rel (0) target = $region21
    $region20: #{tpu_custom_call.1} parent=1 // pred_region
      %42 = dma.done [#allocation6], 2048
    $region21: #{tpu_custom_call.1} parent=1 // pred_fallthru
      _
    %v43 = vld [vmem:[#allocation2] sm:$0xff]
    %v44 = vld [vmem:[#allocation2 + $0x8] sm:$0xff]
    %v45 = vld [vmem:[#allocation2 + $0x10] sm:$0xff]
    %v46 = vld [vmem:[#allocation2 + $0x18] sm:$0xff]
    %v47 = vld [vmem:[#allocation2 + $0x20] sm:$0xff]
    %v48 = vld [vmem:[#allocation2 + $0x28] sm:$0xff]
    %v49 = vld [vmem:[#allocation2 + $0x30] sm:$0xff]
    %v50 = vld [vmem:[#allocation2 + $0x38] sm:$0xff]
    %v51 = vld [vmem:[#allocation2 + $0x40] sm:$0xff]
    %v52 = vld [vmem:[#allocation2 + $0x48] sm:$0xff]
    %v53 = vld [vmem:[#allocation2 + $0x50] sm:$0xff]
    %v54 = vld [vmem:[#allocation2 + $0x58] sm:$0xff]
    %v55 = vld [vmem:[#allocation2 + $0x60] sm:$0xff]
    %v56 = vld [vmem:[#allocation2 + $0x68] sm:$0xff]
    %v57 = vld [vmem:[#allocation2 + $0x70] sm:$0xff]
    %v58 = vld [vmem:[#allocation2 + $0x78] sm:$0xff]
    %v59 = vld [vmem:[#allocation5] sm:$0xff]
    %v60 = vld [vmem:[#allocation5 + $0x8] sm:$0xff]
    %v61 = vld [vmem:[#allocation5 + $0x10] sm:$0xff]
    %v62 = vld [vmem:[#allocation5 + $0x18] sm:$0xff]
    %v63 = vld [vmem:[#allocation5 + $0x20] sm:$0xff]
    %v64 = vld [vmem:[#allocation5 + $0x28] sm:$0xff]
    %v65 = vld [vmem:[#allocation5 + $0x30] sm:$0xff]
    %v66 = vld [vmem:[#allocation5 + $0x38] sm:$0xff]
    %v67 = vld [vmem:[#allocation5 + $0x40] sm:$0xff]
    %v68 = vld [vmem:[#allocation5 + $0x48] sm:$0xff]
    %v69 = vld [vmem:[#allocation5 + $0x50] sm:$0xff]
    %v70 = vld [vmem:[#allocation5 + $0x58] sm:$0xff]
    %v71 = vld [vmem:[#allocation5 + $0x60] sm:$0xff]
    %v72 = vld [vmem:[#allocation5 + $0x68] sm:$0xff]
    %v73 = vld [vmem:[#allocation5 + $0x70] sm:$0xff]
    %v74 = vld [vmem:[#allocation5 + $0x78] sm:$0xff]
    %v75 = vld [vmem:[%s2] sm:$0x1]
    %v77 = vlaneseq
    %v78 = vshrl.u32 %v77, 7
    %v79 = vsub.s32 0, %v78
    %v80 = vrot.slane %v75, %v79
    %82 = vmatprep.subr.mxu0 0.0
    %83 = vmatpush1.msra.mxu0 %v74
    %84 = vmatprep.subr.mxu0 0.0
    %85 = vmatpush1.msra.mxu0 %v73
    %86 = vmatprep.subr.mxu0 0.0
    %87 = vmatpush1.msra.mxu0 %v72
    %88 = vmatprep.subr.mxu0 0.0
    %89 = vmatpush1.msra.mxu0 %v71
    %90 = vmatprep.subr.mxu0 0.0
    %91 = vmatpush1.msra.mxu0 %v70
    %92 = vmatprep.subr.mxu0 0.0
    %93 = vmatpush1.msra.mxu0 %v69
    %94 = vmatprep.subr.mxu0 0.0
    %95 = vmatpush1.msra.mxu0 %v68
    %96 = vmatprep.subr.mxu0 0.0
    %97 = vmatpush1.msra.mxu0 %v67
    %98 = vmatprep.subr.mxu0 0.0
    %99 = vmatpush1.msra.mxu0 %v66
    %100 = vmatprep.subr.mxu0 0.0
    %101 = vmatpush1.msra.mxu0 %v65
    %102 = vmatprep.subr.mxu0 0.0
    %103 = vmatpush1.msra.mxu0 %v64
    %104 = vmatprep.subr.mxu0 0.0
    %105 = vmatpush1.msra.mxu0 %v63
    %106 = vmatprep.subr.mxu0 0.0
    %107 = vmatpush1.msra.mxu0 %v62
    %108 = vmatprep.subr.mxu0 0.0
    %109 = vmatpush1.msra.mxu0 %v61
    %110 = vmatprep.subr.mxu0 0.0
    %111 = vmatpush1.msra.mxu0 %v60
    %112 = vmatprep.subr.mxu0 0.0
    %113 = vmatpush1.msra.mxu0 %v59
    %114 = vmatprep.subr.mxu0 0.0
    %115 = vmatpush2.msra.mxu0 0.0
    %116 = vmatprep.subr.mxu0 0.0
    %117 = vmatpush2.msra.mxu0 0.0
    %118 = vmatprep.subr.mxu0 0.0
    %119 = vmatpush2.msra.mxu0 0.0
    %120 = vmatprep.subr.mxu0 0.0
    %121 = vmatpush2.msra.mxu0 0.0
    %122 = vmatprep.subr.mxu0 0.0
    %123 = vmatpush2.msra.mxu0 0.0
    %124 = vmatprep.subr.mxu0 0.0
    %125 = vmatpush2.msra.mxu0 0.0
    %126 = vmatprep.subr.mxu0 0.0
    %127 = vmatpush2.msra.mxu0 0.0
    %128 = vmatprep.subr.mxu0 0.0
    %129 = vmatpush2.msra.mxu0 0.0
    %130 = vmatprep.subr.mxu0 0.0
    %131 = vmatpush2.msra.mxu0 0.0
    %132 = vmatprep.subr.mxu0 0.0
    %133 = vmatpush2.msra.mxu0 0.0
    %134 = vmatprep.subr.mxu0 0.0
    %135 = vmatpush2.msra.mxu0 0.0
    %136 = vmatprep.subr.mxu0 0.0
    %137 = vmatpush2.msra.mxu0 0.0
    %138 = vmatprep.subr.mxu0 0.0
    %139 = vmatpush2.msra.mxu0 0.0
    %140 = vmatprep.subr.mxu0 0.0
    %141 = vmatpush2.msra.mxu0 0.0
    %142 = vmatprep.subr.mxu0 0.0
    %143 = vmatpush2.msra.mxu0 0.0
    %144 = vmatprep.subr.mxu0 0.0
    %145 = vmatpush2.msra.mxu0 0.0
    %146 = vmatprep.mubr.f32.mxu0 0.0
    %147 = vmatmul.mubr.f32.gmra.mxu0 %v43
    %v148 = vpop.f32.mrf.mxu0
    %v149 = vadd.f32 %v80, %v148
    %v150 = vpop.f32.mrf.mxu0
    %151 = vmatprep.mubr.f32.mxu0 0.0
    %152 = vmatmul.mubr.f32.gmra.mxu0 %v44
    %v153 = vpop.f32.mrf.mxu0
    %v154 = vadd.f32 %v80, %v153
    %v155 = vpop.f32.mrf.mxu0
    %156 = vmatprep.mubr.f32.mxu0 0.0
    %157 = vmatmul.mubr.f32.gmra.mxu0 %v45
    %v158 = vpop.f32.mrf.mxu0
    %v159 = vadd.f32 %v80, %v158
    %v160 = vpop.f32.mrf.mxu0
    %161 = vmatprep.mubr.f32.mxu0 0.0
    %162 = vmatmul.mubr.f32.gmra.mxu0 %v46
    %v163 = vpop.f32.mrf.mxu0
    %v164 = vadd.f32 %v80, %v163
    %v165 = vpop.f32.mrf.mxu0
    %166 = vmatprep.mubr.f32.mxu0 0.0
    %167 = vmatmul.mubr.f32.gmra.mxu0 %v47
    %v168 = vpop.f32.mrf.mxu0
    %v169 = vadd.f32 %v80, %v168
    %v170 = vpop.f32.mrf.mxu0
    %171 = vmatprep.mubr.f32.mxu0 0.0
    %172 = vmatmul.mubr.f32.gmra.mxu0 %v48
    %v173 = vpop.f32.mrf.mxu0
    %v174 = vadd.f32 %v80, %v173
    %v175 = vpop.f32.mrf.mxu0
    %176 = vmatprep.mubr.f32.mxu0 0.0
    %177 = vmatmul.mubr.f32.gmra.mxu0 %v49
    %v178 = vpop.f32.mrf.mxu0
    %v179 = vadd.f32 %v80, %v178
    %v180 = vpop.f32.mrf.mxu0
    %181 = vmatprep.mubr.f32.mxu0 0.0
    %182 = vmatmul.mubr.f32.gmra.mxu0 %v50
    %v183 = vpop.f32.mrf.mxu0
    %v184 = vadd.f32 %v80, %v183
    %v185 = vpop.f32.mrf.mxu0
    %186 = vmatprep.mubr.f32.mxu0 0.0
    %187 = vmatmul.mubr.f32.gmra.mxu0 %v51
    %v188 = vpop.f32.mrf.mxu0
    %v189 = vadd.f32 %v80, %v188
    %v190 = vpop.f32.mrf.mxu0
    %191 = vmatprep.mubr.f32.mxu0 0.0
    %192 = vmatmul.mubr.f32.gmra.mxu0 %v52
    %v193 = vpop.f32.mrf.mxu0
    %v194 = vadd.f32 %v80, %v193
    %v195 = vpop.f32.mrf.mxu0
    %196 = vmatprep.mubr.f32.mxu0 0.0
    %197 = vmatmul.mubr.f32.gmra.mxu0 %v53
    %v198 = vpop.f32.mrf.mxu0
    %v199 = vadd.f32 %v80, %v198
    %v200 = vpop.f32.mrf.mxu0
    %201 = vmatprep.mubr.f32.mxu0 0.0
    %202 = vmatmul.mubr.f32.gmra.mxu0 %v54
    %v203 = vpop.f32.mrf.mxu0
    %v204 = vadd.f32 %v80, %v203
    %v205 = vpop.f32.mrf.mxu0
    %206 = vmatprep.mubr.f32.mxu0 0.0
    %207 = vmatmul.mubr.f32.gmra.mxu0 %v55
    %v208 = vpop.f32.mrf.mxu0
    %v209 = vadd.f32 %v80, %v208
    %v210 = vpop.f32.mrf.mxu0
    %211 = vmatprep.mubr.f32.mxu0 0.0
    %212 = vmatmul.mubr.f32.gmra.mxu0 %v56
    %v213 = vpop.f32.mrf.mxu0
    %v214 = vadd.f32 %v80, %v213
    %v215 = vpop.f32.mrf.mxu0
    %216 = vmatprep.mubr.f32.mxu0 0.0
    %217 = vmatmul.mubr.f32.gmra.mxu0 %v57
    %v218 = vpop.f32.mrf.mxu0
    %v219 = vadd.f32 %v80, %v218
    %v220 = vpop.f32.mrf.mxu0
    %221 = vmatprep.mubr.f32.mxu0 0.0
    %222 = vmatmul.mubr.f32.gmra.mxu0 %v58
    %v223 = vpop.f32.mrf.mxu0
    %v224 = vadd.f32 %v80, %v223
    %v225 = vpop.f32.mrf.mxu0
    %226 = vdwg.mxu0
    %v227 = vmax.f32 %v149, 0.0
    %v228 = vmax.f32 %v154, 0.0
    %v229 = vmax.f32 %v159, 0.0
    %v230 = vmax.f32 %v164, 0.0
    %v231 = vmax.f32 %v169, 0.0
    %v232 = vmax.f32 %v174, 0.0
    %v233 = vmax.f32 %v179, 0.0
    %v234 = vmax.f32 %v184, 0.0
    %v235 = vmax.f32 %v189, 0.0
    %v236 = vmax.f32 %v194, 0.0
    %v237 = vmax.f32 %v199, 0.0
    %v238 = vmax.f32 %v204, 0.0
    %v239 = vmax.f32 %v209, 0.0
    %v240 = vmax.f32 %v214, 0.0
    %v241 = vmax.f32 %v219, 0.0
    %v242 = vmax.f32 %v224, 0.0
    %243 = vst [vmem:[#allocation7] sm:$0xff] %v227
    %244 = vst [vmem:[#allocation7 + $0x8] sm:$0xff] %v228
    %245 = vst [vmem:[#allocation7 + $0x10] sm:$0xff] %v229
    %246 = vst [vmem:[#allocation7 + $0x18] sm:$0xff] %v230
    %247 = vst [vmem:[#allocation7 + $0x20] sm:$0xff] %v231
    %248 = vst [vmem:[#allocation7 + $0x28] sm:$0xff] %v232
    %249 = vst [vmem:[#allocation7 + $0x30] sm:$0xff] %v233
    %250 = vst [vmem:[#allocation7 + $0x38] sm:$0xff] %v234
    %251 = vst [vmem:[#allocation7 + $0x40] sm:$0xff] %v235
    %252 = vst [vmem:[#allocation7 + $0x48] sm:$0xff] %v236
    %253 = vst [vmem:[#allocation7 + $0x50] sm:$0xff] %v237
    %254 = vst [vmem:[#allocation7 + $0x58] sm:$0xff] %v238
    %255 = vst [vmem:[#allocation7 + $0x60] sm:$0xff] %v239
    %256 = vst [vmem:[#allocation7 + $0x68] sm:$0xff] %v240
    %257 = vst [vmem:[#allocation7 + $0x70] sm:$0xff] %v241
    %258 = vst [vmem:[#allocation7 + $0x78] sm:$0xff] %v242
    // Predicated region
    $region22: #{tpu_custom_call.1} parent=1 // pred_check
      _
    $region23: #{tpu_custom_call.1} parent=1 // pred_check_branch
      %260 = sbr.rel (0) target = $region25
    $region24: #{tpu_custom_call.1} parent=1 // pred_region
      %s262 = ssub.s32 2048, 2048
      %263 = vsyncadd [#allocation4], %s262
      %s264 = sshll.u32 [#allocation7], 4
      %s265 = int_to_ptr.vmem [resolvable:$true] %s264
      %270 = dma.vmem_to_hbm [thread:$0]  %s265, 2048, %s3, [#allocation4], 128, 128, 8
    $region25: #{tpu_custom_call.1} parent=1 // pred_fallthru
      _
    // Predicated region
    $region26: #{tpu_custom_call.1} parent=1 // pred_check
      _
    $region27: #{tpu_custom_call.1} parent=1 // pred_check_branch
      %272 = sbr.rel (0) target = $region29
    $region28: #{tpu_custom_call.1} parent=1 // pred_region
      %273 = dma.done [#allocation4], 2048
    $region29: #{tpu_custom_call.1} parent=1 // pred_fallthru
      _
    %274 = vsyncpa [#allocation3], 1
    %275 = vsyncpa [#allocation6], 1
    %276 = vsyncpa [#allocation4], 1

</llo_original>
